<compile_context>
chip_gen: v7x
topology: tpu7x:2x2x1
jax: 0.10.0
libtpu: 0.0.40
codegen_flags: <defaults>
</compile_context>

<pallas_src>
import functools

import jax
import jax.numpy as jnp
from jax.experimental import pallas as pl
from jax.experimental.pallas import tpu as pltpu


def _round_up(x, m):
    return (x + m - 1) // m * m


def _patch_merging_matmul_kernel(x_ref, w_ref, b_ref, o_ref):
    # x_ref: (tm, K_pad)  w_ref: (K_pad, tn)  b_ref: (1, tn)  o_ref: (tm, tn)
    acc = jnp.dot(x_ref[...], w_ref[...], preferred_element_type=jnp.float32)
    acc = acc + b_ref[...].astype(jnp.float32)        # broadcast over rows
    o_ref[...] = acc.astype(o_ref.dtype)


def _space_to_depth(x, df):
    """nn.Unfold(kernel=stride=df, padding=0) + view + permute as layout ops.

    x: (B, C, H, W) -> (B, new_h, new_w, C*df*df) with per-location flat
    ordering (c, kh, kw), matching torch.nn.Unfold's channel-major layout.
    """
    B, C, H, W = x.shape
    nh, nw = H // df, W // df
    x = x.reshape(B, C, nh, df, nw, df)
    x = jnp.transpose(x, (0, 2, 4, 1, 3, 5))          # (B, nh, nw, C, df, df)
    return x.reshape(B, nh, nw, C * df * df)


@functools.partial(jax.jit, static_argnames=("downscaling_factor",))
def patch_merging_forward(x, weight, bias, *, downscaling_factor):
    """PatchMerging forward.

    x:      (B, C, H, W)         NCHW, like the PyTorch module.
    weight: (C*df*df, out_ch)    (= torch linear.weight.T)
    bias:   (out_ch,)
    returns (B, H//df, W//df, out_ch)
    """
    df = downscaling_factor
    B, C, H, W = x.shape
    nh, nw = H // df, W // df
    K = C * df * df
    N = weight.shape[1]
    M = B * nh * nw

    # ---- layout plumbing (wrapper side): unfold -> (M, K) slab ----
    x_mat = _space_to_depth(x, df).reshape(M, K)

    # ---- pad to lane-dense tiles: last dims multiples of 128, rows of 8 ----
    K_pad = _round_up(K, 128)
    N_pad = _round_up(N, 128)
    tm = min(512, _round_up(M, 8))           # big row tile: fills MXU M dim
    tn = min(512, N_pad)                     # bounded weight/output tile
    M_pad = _round_up(M, tm)

    x_mat = jnp.pad(x_mat, ((0, M_pad - M), (0, K_pad - K)))
    w_pad = jnp.pad(weight, ((0, K_pad - K), (0, N_pad - N)))
    b_pad = jnp.pad(bias.reshape(1, N), ((0, 0), (0, N_pad - N)))

    grid = (M_pad // tm, N_pad // tn)

    # VMEM budget: double-buffered x / weight / bias / out tiles (+slack).
    x_isz = jnp.dtype(x.dtype).itemsize
    w_isz = jnp.dtype(weight.dtype).itemsize
    vmem_bytes = (2 * tm * (K_pad + tn) * x_isz
                  + 2 * (K_pad * tn + tn) * w_isz)
    vmem_limit = int(min(max(2 * vmem_bytes, 8 << 20), 48 << 20))

    cost = pl.CostEstimate(
        flops=2 * M * K * N,
        transcendentals=0,
        bytes_accessed=(M * K + M * N) * x_isz + K * N * w_isz,
    )

    out_pad = pl.pallas_call(
        _patch_merging_matmul_kernel,
        out_shape=jax.ShapeDtypeStruct((M_pad, N_pad), x.dtype),
        grid_spec=pltpu.PrefetchScalarGridSpec(
            num_scalar_prefetch=0,
            grid=grid,
            in_specs=[
                # activations: same block across n -> Pallas skips re-DMA
                pl.BlockSpec((tm, K_pad), lambda m, n: (m, 0)),
                pl.BlockSpec((K_pad, tn), lambda m, n: (0, n)),   # weight
                pl.BlockSpec((1, tn), lambda m, n: (0, n)),       # bias
            ],
            out_specs=pl.BlockSpec((tm, tn), lambda m, n: (m, n)),
        ),
        compiler_params=pltpu.CompilerParams(
            dimension_semantics=("parallel", "parallel"),
            vmem_limit_bytes=vmem_limit,
        ),
        cost_estimate=cost,
    )(x_mat, w_pad, b_pad)

    # Slice padding off and restore (B, new_h, new_w, out_ch).
    return out_pad[:M, :N].reshape(B, nh, nw, N)


def patch_merging_reference(x, weight, bias, downscaling_factor):
    """Pure-JAX reference mirroring the PyTorch forward."""
    y = _space_to_depth(x, downscaling_factor)                 # (B, nh, nw, K)
    return jnp.einsum("bhwk,kn->bhwn", y, weight) + bias


if __name__ == "__main__":
    B, C, H, W = 2, 4, 16, 16
    df = 2
    out_channels = 32

    key = jax.random.PRNGKey(0)
    kx, kw, kb = jax.random.split(key, 3)

    x = jax.random.normal(kx, (B, C, H, W), dtype=jnp.float32)
    K = C * df * df
    weight = 0.1 * jax.random.normal(kw, (K, out_channels), dtype=jnp.float32)
    bias = 0.1 * jax.random.normal(kb, (out_channels,), dtype=jnp.float32)

    out = patch_merging_forward(x, weight, bias, downscaling_factor=df)
    out = jax.block_until_ready(out)

    ref = patch_merging_reference(x, weight, bias, df)
    assert out.shape == (B, H // df, W // df, out_channels)
    assert jnp.allclose(out, ref, atol=1e-4, rtol=1e-4), "mismatch vs reference"

    print("KERNEL_OK")
</pallas_src>

<mosaic_0001>
module attributes {stable_mosaic.version = 11 : i64} {
  func.func @_patch_merging_matmul_kernel(%arg0: i32, %arg1: i32, %arg2: memref<128x128xf32, #tpu.memory_space<vmem>>, %arg3: memref<128x128xf32, #tpu.memory_space<vmem>>, %arg4: memref<1x128xf32, #tpu.memory_space<vmem>>, %arg5: memref<128x128xf32, #tpu.memory_space<vmem>>) attributes {dimension_semantics = [#tpu.dimension_semantics<parallel>, #tpu.dimension_semantics<parallel>], iteration_bounds = array<i64: 1, 1>, scalar_prefetch = 0 : i64, scratch_operands = 0 : i64, tpu.core_type = #tpu.core_type<tc>, window_params = [{transform_indices = @transform_0, window_bounds = array<i64: 128, 128>}, {transform_indices = @transform_1, window_bounds = array<i64: 128, 128>}, {transform_indices = @transform_2, window_bounds = array<i64: 1, 128>}, {transform_indices = @transform_3, window_bounds = array<i64: 128, 128>}]} {
    %c0 = arith.constant 0 : index
    %c0_0 = arith.constant 0 : index
    %0 = vector.load %arg2[%c0, %c0_0] : memref<128x128xf32, #tpu.memory_space<vmem>>, vector<128x128xf32>
    %c0_1 = arith.constant 0 : index
    %c0_2 = arith.constant 0 : index
    %1 = vector.load %arg3[%c0_1, %c0_2] : memref<128x128xf32, #tpu.memory_space<vmem>>, vector<128x128xf32>
    %cst = arith.constant dense<0.000000e+00> : vector<128x128xf32>
    %2 = tpu.matmul %0, %1, %cst {dimension_numbers = #tpu.dot_dimension_numbers<[1], [0], [0], [1], [0, 0, 1, 1], [], []>} : vector<128x128xf32>, vector<128x128xf32>, vector<128x128xf32> -> vector<128x128xf32>
    %c0_3 = arith.constant 0 : index
    %c0_4 = arith.constant 0 : index
    %3 = vector.load %arg4[%c0_3, %c0_4] : memref<1x128xf32, #tpu.memory_space<vmem>>, vector<1x128xf32>
    %4 = vector.broadcast %3 : vector<1x128xf32> to vector<128x128xf32>
    %5 = arith.addf %2, %4 : vector<128x128xf32>
    %c0_5 = arith.constant 0 : index
    %c0_6 = arith.constant 0 : index
    %6 = vector.load %arg5[%c0_5, %c0_6] : memref<128x128xf32, #tpu.memory_space<vmem>>, vector<128x128xf32>
    tpu.vector_store %arg5[%c0_5, %c0_6], %5 {strides = array<i32>} : memref<128x128xf32, #tpu.memory_space<vmem>>, vector<128x128xf32>,
    return
  }
  func.func @transform_0(%arg0: i32, %arg1: i32) -> (i32, i32) {
    %c0_i32 = arith.constant 0 : i32
    %c0_i32_0 = arith.constant 0 : i32
    return %arg0, %c0_i32 : i32, i32
  }
  func.func @transform_1(%arg0: i32, %arg1: i32) -> (i32, i32) {
    %c0_i32 = arith.constant 0 : i32
    %c0_i32_0 = arith.constant 0 : i32
    return %c0_i32, %arg1 : i32, i32
  }
  func.func @transform_2(%arg0: i32, %arg1: i32) -> (i32, i32) {
    %c0_i32 = arith.constant 0 : i32
    %c0_i32_0 = arith.constant 0 : i32
    return %c0_i32, %arg1 : i32, i32
  }
  func.func @transform_3(%arg0: i32, %arg1: i32) -> (i32, i32) {
    %c0_i32 = arith.constant 0 : i32
    return %arg0, %arg1 : i32, i32
  }
}

</mosaic_0001>

<llo_original>
// kernel: patch_merging_forward.1
$region0: #{patch_merging_forward.1}
  #allocation0 [shape = 'u32[]', space=smem, size = 0x4, offset = 0x4, fixed_abs, tag = 'smem constant byte address 0x4 - core index']
  #allocation1 [shape = 'u32[144,128]{1,0:T(1,128)}', space=vmem, size = 0x12000, scoped, tag = 'internal scratch']
  %s0 = inlined_call_operand.vmem [shape: f32[128,128], index: 0, kind: input, shape index: {}]
  %s1 = inlined_call_operand.vmem [shape: f32[128,128], index: 1, kind: input, shape index: {}]
  %s2 = inlined_call_operand.vmem [shape: f32[1,128], index: 2, kind: input, shape index: {}]
  %s3 = inlined_call_operand.hbm [shape: f32[128,128], index: 3, kind: output, shape index: {}]
  %s4 = sld [smem:[#allocation0]]
  $region22: #{patch_merging_forward.1} parent=0
    _
  %s6 = ssub.s32 1, %s4
  %s7 = scalar_select 0, %s6, %s4
  $region1: #{patch_merging_forward.1} parent=0
    #allocation2 [shape = 'u8[65536]{0}', space=vmem, size = 0x10000, scoped, tag = 'output window, operand 0, single buffered']
    #allocation3 [shape = 's32[1]{0}', space=sflag, size = 0x4, scoped, tag = 'scoped memory for patch_merging_forward.1']
    %8 = vsyncpa [#allocation3], 0
    // Predicated region
    $region2: #{patch_merging_forward.1} parent=1 // pred_check
      _
    $region3: #{patch_merging_forward.1} parent=1 // pred_check_branch
      %10 = sbr.rel (0) target = $region5
    $region4: #{patch_merging_forward.1} parent=1 // pred_region
      _
    $region5: #{patch_merging_forward.1} parent=1 // pred_fallthru
      _
    // Predicated region
    $region6: #{patch_merging_forward.1} parent=1 // pred_check
      _
    $region7: #{patch_merging_forward.1} parent=1 // pred_check_branch
      %12 = sbr.rel (0) target = $region9
    $region8: #{patch_merging_forward.1} parent=1 // pred_region
      _
    $region9: #{patch_merging_forward.1} parent=1 // pred_fallthru
      _
    // Predicated region
    $region10: #{patch_merging_forward.1} parent=1 // pred_check
      _
    $region11: #{patch_merging_forward.1} parent=1 // pred_check_branch
      %14 = sbr.rel (0) target = $region13
    $region12: #{patch_merging_forward.1} parent=1 // pred_region
      _
    $region13: #{patch_merging_forward.1} parent=1 // pred_fallthru
      _
    %v15 = vld [vmem:[%s0] sm:$0xff]
    %v16 = vld [vmem:[%s0 + $0x8] sm:$0xff]
    %v17 = vld [vmem:[%s0 + $0x10] sm:$0xff]
    %v18 = vld [vmem:[%s0 + $0x18] sm:$0xff]
    %v19 = vld [vmem:[%s0 + $0x20] sm:$0xff]
    %v20 = vld [vmem:[%s0 + $0x28] sm:$0xff]
    %v21 = vld [vmem:[%s0 + $0x30] sm:$0xff]
    %v22 = vld [vmem:[%s0 + $0x38] sm:$0xff]
    %v23 = vld [vmem:[%s0 + $0x40] sm:$0xff]
    %v24 = vld [vmem:[%s0 + $0x48] sm:$0xff]
    %v25 = vld [vmem:[%s0 + $0x50] sm:$0xff]
    %v26 = vld [vmem:[%s0 + $0x58] sm:$0xff]
    %v27 = vld [vmem:[%s0 + $0x60] sm:$0xff]
    %v28 = vld [vmem:[%s0 + $0x68] sm:$0xff]
    %v29 = vld [vmem:[%s0 + $0x70] sm:$0xff]
    %v30 = vld [vmem:[%s0 + $0x78] sm:$0xff]
    %v31 = vld [vmem:[%s1] sm:$0xff]
    %v32 = vld [vmem:[%s1 + $0x8] sm:$0xff]
    %v33 = vld [vmem:[%s1 + $0x10] sm:$0xff]
    %v34 = vld [vmem:[%s1 + $0x18] sm:$0xff]
    %v35 = vld [vmem:[%s1 + $0x20] sm:$0xff]
    %v36 = vld [vmem:[%s1 + $0x28] sm:$0xff]
    %v37 = vld [vmem:[%s1 + $0x30] sm:$0xff]
    %v38 = vld [vmem:[%s1 + $0x38] sm:$0xff]
    %v39 = vld [vmem:[%s1 + $0x40] sm:$0xff]
    %v40 = vld [vmem:[%s1 + $0x48] sm:$0xff]
    %v41 = vld [vmem:[%s1 + $0x50] sm:$0xff]
    %v42 = vld [vmem:[%s1 + $0x58] sm:$0xff]
    %v43 = vld [vmem:[%s1 + $0x60] sm:$0xff]
    %v44 = vld [vmem:[%s1 + $0x68] sm:$0xff]
    %v45 = vld [vmem:[%s1 + $0x70] sm:$0xff]
    %v46 = vld [vmem:[%s1 + $0x78] sm:$0xff]
    %v47 = vld [vmem:[%s2] sm:$0x1]
    %v49 = vlaneseq
    %v50 = vshrl.u32 %v49, 7
    %v51 = vsub.s32 0, %v50
    %v52 = vrot.slane %v47, %v51
    %54 = vmatprep.subr.mxu0 0.0
    %55 = vmatpush1.msra.mxu0 %v31
    %56 = vmatprep.subr.mxu0 0.0
    %57 = vmatpush1.msra.mxu0 %v32
    %58 = vmatprep.subr.mxu0 0.0
    %59 = vmatpush1.msra.mxu0 %v33
    %60 = vmatprep.subr.mxu0 0.0
    %61 = vmatpush1.msra.mxu0 %v34
    %62 = vmatprep.subr.mxu0 0.0
    %63 = vmatpush1.msra.mxu0 %v35
    %64 = vmatprep.subr.mxu0 0.0
    %65 = vmatpush1.msra.mxu0 %v36
    %66 = vmatprep.subr.mxu0 0.0
    %67 = vmatpush1.msra.mxu0 %v37
    %68 = vmatprep.subr.mxu0 0.0
    %69 = vmatpush1.msra.mxu0 %v38
    %70 = vmatprep.subr.mxu0 0.0
    %71 = vmatpush1.msra.mxu0 %v39
    %72 = vmatprep.subr.mxu0 0.0
    %73 = vmatpush1.msra.mxu0 %v40
    %74 = vmatprep.subr.mxu0 0.0
    %75 = vmatpush1.msra.mxu0 %v41
    %76 = vmatprep.subr.mxu0 0.0
    %77 = vmatpush1.msra.mxu0 %v42
    %78 = vmatprep.subr.mxu0 0.0
    %79 = vmatpush1.msra.mxu0 %v43
    %80 = vmatprep.subr.mxu0 0.0
    %81 = vmatpush1.msra.mxu0 %v44
    %82 = vmatprep.subr.mxu0 0.0
    %83 = vmatpush1.msra.mxu0 %v45
    %84 = vmatprep.subr.mxu0 0.0
    %85 = vmatpush1.msra.mxu0 %v46
    %86 = vmatprep.subr.mxu0 0.0
    %87 = vmatpush1.msra.mxu0 0.0
    %88 = vmatprep.subr.mxu0 0.0
    %89 = vmatpush1.msra.mxu0 0.0
    %90 = vmatprep.subr.mxu0 0.0
    %91 = vmatpush1.msra.mxu0 0.0
    %92 = vmatprep.subr.mxu0 0.0
    %93 = vmatpush1.msra.mxu0 0.0
    %94 = vmatprep.subr.mxu0 0.0
    %95 = vmatpush1.msra.mxu0 0.0
    %96 = vmatprep.subr.mxu0 0.0
    %97 = vmatpush1.msra.mxu0 0.0
    %98 = vmatprep.subr.mxu0 0.0
    %99 = vmatpush1.msra.mxu0 0.0
    %100 = vmatprep.subr.mxu0 0.0
    %101 = vmatpush1.msra.mxu0 0.0
    %102 = vmatprep.subr.mxu0 0.0
    %103 = vmatpush1.msra.mxu0 0.0
    %104 = vmatprep.subr.mxu0 0.0
    %105 = vmatpush1.msra.mxu0 0.0
    %106 = vmatprep.subr.mxu0 0.0
    %107 = vmatpush1.msra.mxu0 0.0
    %108 = vmatprep.subr.mxu0 0.0
    %109 = vmatpush1.msra.mxu0 0.0
    %110 = vmatprep.subr.mxu0 0.0
    %111 = vmatpush1.msra.mxu0 0.0
    %112 = vmatprep.subr.mxu0 0.0
    %113 = vmatpush1.msra.mxu0 0.0
    %114 = vmatprep.subr.mxu0 0.0
    %115 = vmatpush1.msra.mxu0 0.0
    %116 = vmatprep.subr.mxu0 0.0
    %117 = vmatpush1.msra.mxu0 0.0
    %118 = vmatprep.mubr.f32.mxu0 0.0
    %119 = vmatmul.mubr.f32.gmra.mrb[0].mxu0 %v15
    %v120 = vpop.f32.mrb[0].mxu0
    %v121 = vadd.f32 %v52, %v120
    %v122 = vpop.f32.mrb[0].mxu0
    %123 = vmatprep.mubr.f32.mxu0 0.0
    %124 = vmatmul.mubr.f32.gmra.mrb[0].mxu0 %v16
    %v125 = vpop.f32.mrb[0].mxu0
    %v126 = vadd.f32 %v52, %v125
    %v127 = vpop.f32.mrb[0].mxu0
    %128 = vmatprep.mubr.f32.mxu0 0.0
    %129 = vmatmul.mubr.f32.gmra.mrb[0].mxu0 %v17
    %v130 = vpop.f32.mrb[0].mxu0
    %v131 = vadd.f32 %v52, %v130
    %v132 = vpop.f32.mrb[0].mxu0
    %133 = vmatprep.mubr.f32.mxu0 0.0
    %134 = vmatmul.mubr.f32.gmra.mrb[0].mxu0 %v18
    %v135 = vpop.f32.mrb[0].mxu0
    %v136 = vadd.f32 %v52, %v135
    %v137 = vpop.f32.mrb[0].mxu0
    %138 = vmatprep.mubr.f32.mxu0 0.0
    %139 = vmatmul.mubr.f32.gmra.mrb[0].mxu0 %v19
    %v140 = vpop.f32.mrb[0].mxu0
    %v141 = vadd.f32 %v52, %v140
    %v142 = vpop.f32.mrb[0].mxu0
    %143 = vmatprep.mubr.f32.mxu0 0.0
    %144 = vmatmul.mubr.f32.gmra.mrb[0].mxu0 %v20
    %v145 = vpop.f32.mrb[0].mxu0
    %v146 = vadd.f32 %v52, %v145
    %v147 = vpop.f32.mrb[0].mxu0
    %148 = vmatprep.mubr.f32.mxu0 0.0
    %149 = vmatmul.mubr.f32.gmra.mrb[0].mxu0 %v21
    %v150 = vpop.f32.mrb[0].mxu0
    %v151 = vadd.f32 %v52, %v150
    %v152 = vpop.f32.mrb[0].mxu0
    %153 = vmatprep.mubr.f32.mxu0 0.0
    %154 = vmatmul.mubr.f32.gmra.mrb[0].mxu0 %v22
    %v155 = vpop.f32.mrb[0].mxu0
    %v156 = vadd.f32 %v52, %v155
    %v157 = vpop.f32.mrb[0].mxu0
    %158 = vmatprep.mubr.f32.mxu0 0.0
    %159 = vmatmul.mubr.f32.gmra.mrb[0].mxu0 %v23
    %v160 = vpop.f32.mrb[0].mxu0
    %v161 = vadd.f32 %v52, %v160
    %v162 = vpop.f32.mrb[0].mxu0
    %163 = vmatprep.mubr.f32.mxu0 0.0
    %164 = vmatmul.mubr.f32.gmra.mrb[0].mxu0 %v24
    %v165 = vpop.f32.mrb[0].mxu0
    %v166 = vadd.f32 %v52, %v165
    %v167 = vpop.f32.mrb[0].mxu0
    %168 = vmatprep.mubr.f32.mxu0 0.0
    %169 = vmatmul.mubr.f32.gmra.mrb[0].mxu0 %v25
    %v170 = vpop.f32.mrb[0].mxu0
    %v171 = vadd.f32 %v52, %v170
    %v172 = vpop.f32.mrb[0].mxu0
    %173 = vmatprep.mubr.f32.mxu0 0.0
    %174 = vmatmul.mubr.f32.gmra.mrb[0].mxu0 %v26
    %v175 = vpop.f32.mrb[0].mxu0
    %v176 = vadd.f32 %v52, %v175
    %v177 = vpop.f32.mrb[0].mxu0
    %178 = vmatprep.mubr.f32.mxu0 0.0
    %179 = vmatmul.mubr.f32.gmra.mrb[0].mxu0 %v27
    %v180 = vpop.f32.mrb[0].mxu0
    %v181 = vadd.f32 %v52, %v180
    %v182 = vpop.f32.mrb[0].mxu0
    %183 = vmatprep.mubr.f32.mxu0 0.0
    %184 = vmatmul.mubr.f32.gmra.mrb[0].mxu0 %v28
    %v185 = vpop.f32.mrb[0].mxu0
    %v186 = vadd.f32 %v52, %v185
    %v187 = vpop.f32.mrb[0].mxu0
    %188 = vmatprep.mubr.f32.mxu0 0.0
    %189 = vmatmul.mubr.f32.gmra.mrb[0].mxu0 %v29
    %v190 = vpop.f32.mrb[0].mxu0
    %v191 = vadd.f32 %v52, %v190
    %v192 = vpop.f32.mrb[0].mxu0
    %193 = vmatprep.mubr.f32.mxu0 0.0
    %194 = vmatmul.mubr.f32.gmra.mrb[0].mxu0 %v30
    %v195 = vpop.f32.mrb[0].mxu0
    %v196 = vadd.f32 %v52, %v195
    %v197 = vpop.f32.mrb[0].mxu0
    %198 = vdwg.mxu0
    %199 = vst [vmem:[#allocation2] sm:$0xff] %v121
    %200 = vst [vmem:[#allocation2 + $0x8] sm:$0xff] %v126
    %201 = vst [vmem:[#allocation2 + $0x10] sm:$0xff] %v131
    %202 = vst [vmem:[#allocation2 + $0x18] sm:$0xff] %v136
    %203 = vst [vmem:[#allocation2 + $0x20] sm:$0xff] %v141
    %204 = vst [vmem:[#allocation2 + $0x28] sm:$0xff] %v146
    %205 = vst [vmem:[#allocation2 + $0x30] sm:$0xff] %v151
    %206 = vst [vmem:[#allocation2 + $0x38] sm:$0xff] %v156
    %207 = vst [vmem:[#allocation2 + $0x40] sm:$0xff] %v161
    %208 = vst [vmem:[#allocation2 + $0x48] sm:$0xff] %v166
    %209 = vst [vmem:[#allocation2 + $0x50] sm:$0xff] %v171
    %210 = vst [vmem:[#allocation2 + $0x58] sm:$0xff] %v176
    %211 = vst [vmem:[#allocation2 + $0x60] sm:$0xff] %v181
    %212 = vst [vmem:[#allocation2 + $0x68] sm:$0xff] %v186
    %213 = vst [vmem:[#allocation2 + $0x70] sm:$0xff] %v191
    %214 = vst [vmem:[#allocation2 + $0x78] sm:$0xff] %v196
    // Predicated region
    $region14: #{patch_merging_forward.1} parent=1 // pred_check
      _
    $region15: #{patch_merging_forward.1} parent=1 // pred_check_branch
      %216 = sbr.rel (0) target = $region17
    $region16: #{patch_merging_forward.1} parent=1 // pred_region
      %s218 = ssub.s32 2048, 2048
      %219 = vsyncadd [#allocation3], %s218
      %s220 = sshll.u32 [#allocation2], 4
      %s221 = int_to_ptr.vmem [resolvable:$true] %s220
      %226 = dma.vmem_to_hbm [thread:$0]  %s221, 2048, %s3, [#allocation3], 128, 128, 8
    $region17: #{patch_merging_forward.1} parent=1 // pred_fallthru
      _
    // Predicated region
    $region18: #{patch_merging_forward.1} parent=1 // pred_check
      _
    $region19: #{patch_merging_forward.1} parent=1 // pred_check_branch
      %228 = sbr.rel (0) target = $region21
    $region20: #{patch_merging_forward.1} parent=1 // pred_region
      %229 = dma.done [#allocation3], 2048
    $region21: #{patch_merging_forward.1} parent=1 // pred_fallthru
      _
    %230 = vsyncpa [#allocation3], 1

</llo_original>
